<compile_context>
chip_gen: v5e
topology: v5e:2x2
jax: 0.10.0
libtpu: 0.0.40
codegen_flags: <defaults>
</compile_context>

<pallas_src>
import functools
import math

import jax
import jax.numpy as jnp
from jax.experimental import pallas as pl
from jax.experimental.pallas import tpu as pltpu

LANE = 128
SUBLANE = 8
ALIGN = SUBLANE * LANE          # 1024-element wrapper padding granularity
CHUNK_ROWS = 512                # in-kernel compute chunk (256 KiB for f32)
TARGET_BLOCK_BYTES = 4 << 20    # ~4 MiB per input per pipelined block


def _dice_kernel(pr_ref, gt_ref, tp_ref, thr_ref, gts_ref, *,
                 logit_t, chunk_m, n_chunks, rem, num_blocks):
    """Per-block partial sums (all (8,128) lane/sublane-parallel):
         tp_ref  <- sum(gt * (sigmoid(pr) > t))
         thr_ref <- sum(sigmoid(pr) > t)
         gts_ref <- sum(gt)
    The final reduce + dice formula happens in the wrapper."""
    n_sub = chunk_m // SUBLANE

    tp_ref[...] = jnp.zeros_like(tp_ref)
    thr_ref[...] = jnp.zeros_like(thr_ref)
    gts_ref[...] = jnp.zeros_like(gts_ref)

    def load_chunk(c):
        r0 = pl.multiple_of(c * chunk_m, chunk_m)
        pr = pr_ref[pl.ds(r0, chunk_m), :].astype(jnp.float32)
        gt = gt_ref[pl.ds(r0, chunk_m), :].astype(jnp.float32)
        # sigmoid(pr) > threshold  <=>  pr > logit(threshold): no transcendental.
        thr = (pr > logit_t).astype(jnp.float32)
        return thr, gt

    def accumulate(thr, gt):
        # (chunk_m,128) -> (chunk_m//8, 8, 128) is a layout-preserving split; summing
        # over the leading axis is pure VALU vreg adds (no per-chunk XLU reduce).
        t3 = thr.reshape(n_sub, SUBLANE, LANE)
        g3 = gt.reshape(n_sub, SUBLANE, LANE)
        tp_ref[...] += jnp.sum(g3 * t3, axis=0)
        thr_ref[...] += jnp.sum(t3, axis=0)
        gts_ref[...] += jnp.sum(g3, axis=0)

    if rem is None:
        # Every element of every block is valid: no masking anywhere.
        @pl.loop(0, n_chunks)
        def _(c):
            thr, gt = load_chunk(c)
            accumulate(thr, gt)
    else:
        # Only the last block contains wrapper padding and/or rows past the array end
        # (unspecified VMEM contents) -> gate the masked path to that block only.
        i = pl.program_id(0)
        last = num_blocks - 1

        @pl.when(i != last)
        def _plain():
            @pl.loop(0, n_chunks)
            def _(c):
                thr, gt = load_chunk(c)
                accumulate(thr, gt)

        @pl.when(i == last)
        def _masked():
            # Element index within one chunk (hoisted out of the chunk loop).
            idx = (jax.lax.broadcasted_iota(jnp.int32, (chunk_m, LANE), 0) * LANE
                   + jax.lax.broadcasted_iota(jnp.int32, (chunk_m, LANE), 1))

            @pl.loop(0, n_chunks)
            def _(c):
                thr, gt = load_chunk(c)
                # `rem` (valid elements in this block) is a trace-time constant and is
                # at most tile_m * 128, so this arithmetic stays safely inside int32.
                valid = idx < (rem - c * (chunk_m * LANE))
                # Mask BOTH operands: beyond the array end the buffer is unspecified.
                accumulate(jnp.where(valid, thr, 0.0), jnp.where(valid, gt, 0.0))


@functools.partial(jax.jit, static_argnames=("eps", "threshold"))
def dice_score(y_pr, y_gt, eps=1e-07, threshold=0.5):
    """Pallas implementation of Dice.forward(y_pr, y_gt). Returns a scalar float32."""
    assert y_pr.shape == y_gt.shape
    n = int(y_pr.size)
    assert n > 0

    # sigmoid(x) > t  <=>  x > logit(t); guard degenerate thresholds outside (0, 1).
    if 0.0 < threshold < 1.0:
        logit_t = float(math.log(threshold / (1.0 - threshold)))
    elif threshold <= 0.0:
        logit_t = float("-inf")      # always true
    else:
        logit_t = float("inf")       # never true

    # Pad only up to the next 1024-element boundary; lane/sublane-aligned inputs pay no
    # copy at all (no more full-tile pad).
    padded_n = -(-n // ALIGN) * ALIGN
    pad = padded_n - n
    pr_flat = y_pr.reshape(-1)
    gt_flat = y_gt.reshape(-1)
    if pad:
        # TODO(synk): if ragged (n % 1024 != 0) shapes dominate the hot path, replace this
        # pad copy with a manual double-buffered make_async_copy loop over pl.ANY inputs.
        pr_flat = jnp.pad(pr_flat, (0, pad))
        gt_flat = jnp.pad(gt_flat, (0, pad))
    m = padded_n // LANE                         # 128-lane rows; multiple of 8

    # Byte-based block sizing so bf16 inputs get proportionally more rows per block.
    pr_isz = jnp.dtype(y_pr.dtype).itemsize
    gt_isz = jnp.dtype(y_gt.dtype).itemsize
    target_rows = TARGET_BLOCK_BYTES // (LANE * max(pr_isz, gt_isz))
    target_rows = max(SUBLANE, (target_rows // SUBLANE) * SUBLANE)

    if m <= CHUNK_ROWS:
        tile_m = m                               # one small block, one chunk
        chunk_m = m
    else:
        target_rows = max(CHUNK_ROWS, (target_rows // CHUNK_ROWS) * CHUNK_ROWS)
        tile_m = min(target_rows, -(-m // CHUNK_ROWS) * CHUNK_ROWS)
        chunk_m = CHUNK_ROWS
    n_chunks = tile_m // chunk_m
    num_blocks = -(-m // tile_m)                 # final block may be partial

    tile_elems = tile_m * LANE
    rem = n - (num_blocks - 1) * tile_elems      # valid elements in the final block
    rem = None if rem == tile_elems else rem     # None -> no masking needed anywhere

    pr2d = pr_flat.reshape(m, LANE)
    gt2d = gt_flat.reshape(m, LANE)

    kernel = functools.partial(
        _dice_kernel, logit_t=logit_t, chunk_m=chunk_m, n_chunks=n_chunks,
        rem=rem, num_blocks=num_blocks)

    # 2 inputs x 2 pipeline buffers + slack for the tiny outputs, in-kernel temporaries
    # and compiler scratch. Explicit so big blocks never hit the scoped-VMEM defaults.
    vmem_limit = int(2 * tile_m * LANE * (pr_isz + gt_isz) + (12 << 20))

    part_shape = jax.ShapeDtypeStruct((num_blocks * SUBLANE, LANE), jnp.float32)
    part_spec = pl.BlockSpec((SUBLANE, LANE), lambda i: (i, 0))

    bytes_accessed = n * (pr_isz + gt_isz) + 3 * num_blocks * SUBLANE * LANE * 4
    cost = pl.CostEstimate(flops=6 * n, transcendentals=0,
                           bytes_accessed=int(bytes_accessed))

    tp_parts, thr_parts, gt_parts = pl.pallas_call(
        kernel,
        out_shape=(part_shape, part_shape, part_shape),
        grid_spec=pltpu.PrefetchScalarGridSpec(
            num_scalar_prefetch=0,
            grid=(num_blocks,),
            in_specs=[
                pl.BlockSpec((tile_m, LANE), lambda i: (i, 0)),
                pl.BlockSpec((tile_m, LANE), lambda i: (i, 0)),
            ],
            out_specs=(part_spec, part_spec, part_spec),
        ),
        compiler_params=pltpu.CompilerParams(
            dimension_semantics=("parallel",),   # v7x: blocks split across both TCs
            vmem_limit_bytes=vmem_limit,
        ),
        cost_estimate=cost,
    )(pr2d, gt2d)

    # Cross-block / cross-core combine + dice formula: tiny epilogue, fused under jit.
    tp = jnp.sum(tp_parts)
    sum_thr = jnp.sum(thr_parts)
    sum_gt = jnp.sum(gt_parts)
    fp = sum_thr - tp
    fn = sum_gt - tp
    return (2.0 * tp + eps) / (2.0 * tp + fn + fp + eps)


def dice_ref(y_pr, y_gt, eps=1e-07, threshold=0.5):
    """Pure-JAX reference mirroring the PyTorch module."""
    y_pr = jax.nn.sigmoid(y_pr)
    y_pr = (y_pr > threshold).astype(y_pr.dtype)
    tp = jnp.sum(y_gt * y_pr)
    fp = jnp.sum(y_pr) - tp
    fn = jnp.sum(y_gt) - tp
    return (2 * tp + eps) / (2 * tp + fn + fp + eps)


if __name__ == "__main__":
    key = jax.random.PRNGKey(0)
    k1, k2, k3, k4 = jax.random.split(key, 4)

    # y_pr: raw logits, y_gt: binary mask. NCHW layout as in PyTorch.
    shape = (2, 4, 16, 16)
    y_pr = jax.random.normal(k1, shape, dtype=jnp.float32)
    y_gt = (jax.random.uniform(k2, shape) > 0.5).astype(jnp.float32)

    score = dice_score(y_pr, y_gt)
    jax.block_until_ready(score)
    ref = dice_ref(y_pr, y_gt)
    assert jnp.allclose(score, ref, rtol=1e-5, atol=1e-6), (score, ref)

    # Ragged shape + non-default threshold exercises the masked last-block path.
    shape2 = (2, 3, 15, 17)
    y_pr2 = jax.random.normal(k3, shape2, dtype=jnp.float32)
    y_gt2 = (jax.random.uniform(k4, shape2) > 0.5).astype(jnp.float32)

    score2 = dice_score(y_pr2, y_gt2, threshold=0.3)
    jax.block_until_ready(score2)
    ref2 = dice_ref(y_pr2, y_gt2, threshold=0.3)
    assert jnp.allclose(score2, ref2, rtol=1e-5, atol=1e-6), (score2, ref2)

    print("KERNEL_OK")
</pallas_src>

<mosaic_0001>
module attributes {stable_mosaic.version = 11 : i64} {
  func.func @_dice_kernel(%arg0: i32, %arg1: memref<16x128xf32, #tpu.memory_space<vmem>>, %arg2: memref<16x128xf32, #tpu.memory_space<vmem>>, %arg3: memref<8x128xf32, #tpu.memory_space<vmem>>, %arg4: memref<8x128xf32, #tpu.memory_space<vmem>>, %arg5: memref<8x128xf32, #tpu.memory_space<vmem>>) attributes {dimension_semantics = [#tpu.dimension_semantics<parallel>], iteration_bounds = array<i64: 1>, scalar_prefetch = 0 : i64, scratch_operands = 0 : i64, tpu.core_type = #tpu.core_type<tc>, window_params = [{transform_indices = @transform_0, window_bounds = array<i64: 16, 128>}, {transform_indices = @transform_1, window_bounds = array<i64: 16, 128>}, {transform_indices = @transform_2, window_bounds = array<i64: 8, 128>}, {transform_indices = @transform_3, window_bounds = array<i64: 8, 128>}, {transform_indices = @transform_4, window_bounds = array<i64: 8, 128>}]} {
    %cst = arith.constant 0.000000e+00 : f32
    %0 = vector.broadcast %cst : f32 to vector<8x128xf32>
    %c0 = arith.constant 0 : index
    %c0_0 = arith.constant 0 : index
    %1 = vector.load %arg3[%c0, %c0_0] : memref<8x128xf32, #tpu.memory_space<vmem>>, vector<8x128xf32>
    tpu.vector_store %arg3[%c0, %c0_0], %0 {strides = array<i32>} : memref<8x128xf32, #tpu.memory_space<vmem>>, vector<8x128xf32>,
    %cst_1 = arith.constant 0.000000e+00 : f32
    %2 = vector.broadcast %cst_1 : f32 to vector<8x128xf32>
    %c0_2 = arith.constant 0 : index
    %c0_3 = arith.constant 0 : index
    %3 = vector.load %arg4[%c0_2, %c0_3] : memref<8x128xf32, #tpu.memory_space<vmem>>, vector<8x128xf32>
    tpu.vector_store %arg4[%c0_2, %c0_3], %2 {strides = array<i32>} : memref<8x128xf32, #tpu.memory_space<vmem>>, vector<8x128xf32>,
    %cst_4 = arith.constant 0.000000e+00 : f32
    %4 = vector.broadcast %cst_4 : f32 to vector<8x128xf32>
    %c0_5 = arith.constant 0 : index
    %c0_6 = arith.constant 0 : index
    %5 = vector.load %arg5[%c0_5, %c0_6] : memref<8x128xf32, #tpu.memory_space<vmem>>, vector<8x128xf32>
    tpu.vector_store %arg5[%c0_5, %c0_6], %4 {strides = array<i32>} : memref<8x128xf32, #tpu.memory_space<vmem>>, vector<8x128xf32>,
    %c0_i32 = arith.constant 0 : i32
    %c1_i32 = arith.constant 1 : i32
    %6 = arith.muli %c0_i32, %c1_i32 : i32
    %c0_i32_7 = arith.constant 0 : i32
    %7 = arith.addi %c0_i32_7, %6 : i32
    %c16_i32 = arith.constant 16 : i32
    %8 = arith.muli %7, %c16_i32 : i32
    %9 = tpu.assume_multiple %8, 16 : i32
    %10 = arith.index_cast %9 : i32 to index
    %c0_8 = arith.constant 0 : index
    %11 = vector.load %arg1[%10, %c0_8] : memref<16x128xf32, #tpu.memory_space<vmem>>, vector<16x128xf32>
    %12 = arith.index_cast %9 : i32 to index
    %c0_9 = arith.constant 0 : index
    %13 = vector.load %arg2[%12, %c0_9] : memref<16x128xf32, #tpu.memory_space<vmem>>, vector<16x128xf32>
    %cst_10 = arith.constant 0.000000e+00 : f32
    %14 = vector.broadcast %cst_10 : f32 to vector<16x128xf32>
    %15 = arith.cmpf ogt, %11, %14 : vector<16x128xf32>
    %16 = arith.extui %15 : vector<16x128xi1> to vector<16x128xi32>
    %17 = arith.sitofp %16 : vector<16x128xi32> to vector<16x128xf32>
    %18 = vector.shape_cast %17 : vector<16x128xf32> to vector<2x8x128xf32>
    %19 = vector.shape_cast %13 : vector<16x128xf32> to vector<2x8x128xf32>
    %c0_11 = arith.constant 0 : index
    %c0_12 = arith.constant 0 : index
    %20 = vector.load %arg3[%c0_11, %c0_12] : memref<8x128xf32, #tpu.memory_space<vmem>>, vector<8x128xf32>
    %21 = arith.mulf %19, %18 : vector<2x8x128xf32>
    %cst_13 = arith.constant dense<0.000000e+00> : vector<8x128xf32>
    %22 = vector.multi_reduction <add>, %21, %cst_13 [0] : vector<2x8x128xf32> to vector<8x128xf32>
    %23 = arith.addf %20, %22 : vector<8x128xf32>
    %c0_14 = arith.constant 0 : index
    %c0_15 = arith.constant 0 : index
    %24 = vector.load %arg3[%c0_14, %c0_15] : memref<8x128xf32, #tpu.memory_space<vmem>>, vector<8x128xf32>
    tpu.vector_store %arg3[%c0_14, %c0_15], %23 {strides = array<i32>} : memref<8x128xf32, #tpu.memory_space<vmem>>, vector<8x128xf32>,
    %c0_16 = arith.constant 0 : index
    %c0_17 = arith.constant 0 : index
    %25 = vector.load %arg4[%c0_16, %c0_17] : memref<8x128xf32, #tpu.memory_space<vmem>>, vector<8x128xf32>
    %cst_18 = arith.constant dense<0.000000e+00> : vector<8x128xf32>
    %26 = vector.multi_reduction <add>, %18, %cst_18 [0] : vector<2x8x128xf32> to vector<8x128xf32>
    %27 = arith.addf %25, %26 : vector<8x128xf32>
    %c0_19 = arith.constant 0 : index
    %c0_20 = arith.constant 0 : index
    %28 = vector.load %arg4[%c0_19, %c0_20] : memref<8x128xf32, #tpu.memory_space<vmem>>, vector<8x128xf32>
    tpu.vector_store %arg4[%c0_19, %c0_20], %27 {strides = array<i32>} : memref<8x128xf32, #tpu.memory_space<vmem>>, vector<8x128xf32>,
    %c0_21 = arith.constant 0 : index
    %c0_22 = arith.constant 0 : index
    %29 = vector.load %arg5[%c0_21, %c0_22] : memref<8x128xf32, #tpu.memory_space<vmem>>, vector<8x128xf32>
    %cst_23 = arith.constant dense<0.000000e+00> : vector<8x128xf32>
    %30 = vector.multi_reduction <add>, %19, %cst_23 [0] : vector<2x8x128xf32> to vector<8x128xf32>
    %31 = arith.addf %29, %30 : vector<8x128xf32>
    %c0_24 = arith.constant 0 : index
    %c0_25 = arith.constant 0 : index
    %32 = vector.load %arg5[%c0_24, %c0_25] : memref<8x128xf32, #tpu.memory_space<vmem>>, vector<8x128xf32>
    tpu.vector_store %arg5[%c0_24, %c0_25], %31 {strides = array<i32>} : memref<8x128xf32, #tpu.memory_space<vmem>>, vector<8x128xf32>,
    %c1_i32_26 = arith.constant 1 : i32
    return
  }
  func.func @transform_0(%arg0: i32) -> (i32, i32) {
    %c0_i32 = arith.constant 0 : i32
    %c0_i32_0 = arith.constant 0 : i32
    return %arg0, %c0_i32 : i32, i32
  }
  func.func @transform_1(%arg0: i32) -> (i32, i32) {
    %c0_i32 = arith.constant 0 : i32
    %c0_i32_0 = arith.constant 0 : i32
    return %arg0, %c0_i32 : i32, i32
  }
  func.func @transform_2(%arg0: i32) -> (i32, i32) {
    %c0_i32 = arith.constant 0 : i32
    %c0_i32_0 = arith.constant 0 : i32
    return %arg0, %c0_i32 : i32, i32
  }
  func.func @transform_3(%arg0: i32) -> (i32, i32) {
    %c0_i32 = arith.constant 0 : i32
    %c0_i32_0 = arith.constant 0 : i32
    return %arg0, %c0_i32 : i32, i32
  }
  func.func @transform_4(%arg0: i32) -> (i32, i32) {
    %c0_i32 = arith.constant 0 : i32
    %c0_i32_0 = arith.constant 0 : i32
    return %arg0, %c0_i32 : i32, i32
  }
}

</mosaic_0001>

<llo_original>
// kernel: dice_score.1
$region0: #{dice_score.1}
  #allocation0 [shape = 'u32[]', space=smem, size = 0x4, offset = 0x4, fixed_abs, tag = 'smem constant byte address 0x4 - core index']
  #allocation1 [shape = 'u32[72,128]{1,0:T(1,128)}', space=vmem, size = 0x9000, scoped, tag = 'internal scratch']
  %s0 = inlined_call_operand.vmem [shape: f32[16,128], index: 0, kind: input, shape index: {}]
  %s1 = inlined_call_operand.vmem [shape: f32[16,128], index: 1, kind: input, shape index: {}]
  %s2 = inlined_call_operand.vmem [shape: f32[8,128], index: 2, kind: output, shape index: {0}]
  %s3 = inlined_call_operand.vmem [shape: f32[8,128], index: 3, kind: output, shape index: {1}]
  %s4 = inlined_call_operand.vmem [shape: f32[8,128], index: 4, kind: output, shape index: {2}]
  %5 = xla_tuple %s2, %s3, %s4
  %s6 = sld [smem:[#allocation0]]
  $region34: #{dice_score.1} parent=0
    _
  %s8 = ssub.s32 1, %s6
  %s9 = scalar_select 0, %s8, %s6
  // Predicated region
  $region2: #{dice_score.1} parent=0 // pred_check
    _
  $region3: #{dice_score.1} parent=0 // pred_check_branch
    %11 = sbr.rel (0) target = $region5
  $region4: #{dice_score.1} parent=0 // pred_region
    _
  $region5: #{dice_score.1} parent=0 // pred_fallthru
    _
  // Predicated region
  $region6: #{dice_score.1} parent=0 // pred_check
    _
  $region7: #{dice_score.1} parent=0 // pred_check_branch
    %13 = sbr.rel (0) target = $region9
  $region8: #{dice_score.1} parent=0 // pred_region
    _
  $region9: #{dice_score.1} parent=0 // pred_fallthru
    _
  %14 = vst [vmem:[%s2] sm:$0xff] 0.0
  %15 = vst [vmem:[%s3] sm:$0xff] 0.0
  %16 = vst [vmem:[%s4] sm:$0xff] 0.0
  %v17 = vld [vmem:[%s0] sm:$0xff]
  %v18 = vld [vmem:[%s0 + $0x8] sm:$0xff]
  %v19 = vld [vmem:[%s1] sm:$0xff]
  %v20 = vld [vmem:[%s1 + $0x8] sm:$0xff]
  %vm21 = vcmp.gt.f32.partialorder %v17, 0.0
  %vm22 = vcmp.gt.f32.partialorder %v18, 0.0
  %v23 = vsel %vm21, 1, 0
  %v24 = vsel %vm22, 1, 0
  %v25 = vcvt.s32.f32 %v23
  %v26 = vcvt.s32.f32 %v24
  %v27 = vld [vmem:[%s2] sm:$0xff]
  %v28 = vmul.f32 %v19, %v25
  %v29 = vmul.f32 %v20, %v26
  %v30 = vadd.f32 %v28, %v29
  %v31 = vadd.f32 %v27, %v30
  %32 = vst [vmem:[%s2] sm:$0xff] %v31
  %v33 = vld [vmem:[%s3] sm:$0xff]
  %v34 = vadd.f32 %v25, %v26
  %v35 = vadd.f32 %v33, %v34
  %36 = vst [vmem:[%s3] sm:$0xff] %v35
  %v37 = vld [vmem:[%s4] sm:$0xff]
  %v38 = vadd.f32 %v19, %v20
  %v39 = vadd.f32 %v37, %v38
  %40 = vst [vmem:[%s4] sm:$0xff] %v39
  // Predicated region
  $region10: #{dice_score.1} parent=0 // pred_check
    _
  $region11: #{dice_score.1} parent=0 // pred_check_branch
    %42 = sbr.rel (0) target = $region13
  $region12: #{dice_score.1} parent=0 // pred_region
    _
  $region13: #{dice_score.1} parent=0 // pred_fallthru
    _
  // Predicated region
  $region14: #{dice_score.1} parent=0 // pred_check
    _
  $region15: #{dice_score.1} parent=0 // pred_check_branch
    %44 = sbr.rel (0) target = $region17
  $region16: #{dice_score.1} parent=0 // pred_region
    _
  $region17: #{dice_score.1} parent=0 // pred_fallthru
    _
  // Predicated region
  $region18: #{dice_score.1} parent=0 // pred_check
    _
  $region19: #{dice_score.1} parent=0 // pred_check_branch
    %46 = sbr.rel (0) target = $region21
  $region20: #{dice_score.1} parent=0 // pred_region
    _
  $region21: #{dice_score.1} parent=0 // pred_fallthru
    _
  // Predicated region
  $region22: #{dice_score.1} parent=0 // pred_check
    _
  $region23: #{dice_score.1} parent=0 // pred_check_branch
    %48 = sbr.rel (0) target = $region25
  $region24: #{dice_score.1} parent=0 // pred_region
    _
  $region25: #{dice_score.1} parent=0 // pred_fallthru
    _
  // Predicated region
  $region26: #{dice_score.1} parent=0 // pred_check
    _
  $region27: #{dice_score.1} parent=0 // pred_check_branch
    %50 = sbr.rel (0) target = $region29
  $region28: #{dice_score.1} parent=0 // pred_region
    _
  $region29: #{dice_score.1} parent=0 // pred_fallthru
    _
  // Predicated region
  $region30: #{dice_score.1} parent=0 // pred_check
    _
  $region31: #{dice_score.1} parent=0 // pred_check_branch
    %52 = sbr.rel (0) target = $region33
  $region32: #{dice_score.1} parent=0 // pred_region
    _
  $region33: #{dice_score.1} parent=0 // pred_fallthru
    _

</llo_original>
